<compile_context>
chip_gen: v7x
topology: tpu7x:2x2x1
jax: 0.10.0
libtpu: 0.0.40
codegen_flags: <defaults>
</compile_context>

<pallas_src>
import functools

import jax
import jax.numpy as jnp
from jax.experimental import pallas as pl
from jax.experimental.pallas import tpu as pltpu

NUM_CLASSES = 5
HIDDEN = 10
OUT_LANES = 8          # lane padding for W / b / logits (full last dim -> legal block)
NEG_BIG = -1e30        # pad-lane bias for the loss path (kills softmax contribution)


# ----------------------------- kernels --------------------------------------

def _logits_kernel(x_ref, w_ref, b_ref, out_ref):
    # logits = x @ (W1 @ W2) + (b1 @ W2 + b2), padded to 8 lanes.
    out_ref[...] = (
        jnp.dot(x_ref[...], w_ref[...], preferred_element_type=jnp.float32)
        + b_ref[...]
    )


def _loss_kernel(x_ref, w_ref, b_ref, y_ref, out_ref, *, batch):
    # Per-row cross-entropy with integer targets. Pad lanes carry a -1e30 bias
    # so no explicit class mask is needed; rows past the true batch are zeroed.
    # Each grid step writes its own (tb, 8) output tile (per-row loss in lane
    # 0), so the grid is fully parallel (megacore friendly); the wrapper does
    # the final sum / batch.
    i = pl.program_id(0)
    tb = out_ref.shape[0]

    logits = (
        jnp.dot(x_ref[...], w_ref[...], preferred_element_type=jnp.float32)
        + b_ref[...]
    )  # (tb, 8); lanes >= NUM_CLASSES sit at ~-1e30 via the masked bias.

    col = jax.lax.broadcasted_iota(jnp.int32, logits.shape, 1)
    m = jnp.max(logits, axis=-1, keepdims=True)                      # (tb, 1)
    lse = m + jnp.log(jnp.sum(jnp.exp(logits - m), axis=-1, keepdims=True))
    # Target logit via iota-compare against the int32 label (no one-hot DMA).
    tgt = jnp.sum(jnp.where(col == y_ref[...], logits, 0.0),
                  axis=-1, keepdims=True)                            # (tb, 1)
    per_row = lse - tgt

    # Mask rows past the true batch (batch was zero-padded to a tile multiple).
    row = i * tb + jax.lax.broadcasted_iota(jnp.int32, (tb, 1), 0)
    per_row = jnp.where(row < batch, per_row, 0.0)

    out_ref[...] = jnp.where(col == 0, per_row, 0.0)                 # lane 0 only


# ----------------------------- wrappers -------------------------------------

def _fold_params(params):
    """Fold Linear(D,10) -> Linear(10,5) into one (D,5) affine, 8-lane padded.

    Returns (w_pad, b_pad, b_masked): b_pad has zeros in the pad lanes (logits
    path); b_masked has -1e30 there (loss path -> no in-kernel class mask)."""
    w1, b1, w2, b2 = params
    hi = jax.lax.Precision.HIGHEST
    w = jnp.dot(w1, w2, precision=hi)            # (D, 5)
    b = jnp.dot(b1, w2, precision=hi) + b2       # (1, 5)
    d = w.shape[0]
    w_pad = jnp.zeros((d, OUT_LANES), jnp.float32).at[:, :NUM_CLASSES].set(w)
    b_pad = jnp.zeros((1, OUT_LANES), jnp.float32).at[:, :NUM_CLASSES].set(b)
    b_msk = jnp.full((1, OUT_LANES), NEG_BIG,
                     jnp.float32).at[:, :NUM_CLASSES].set(b)
    return w_pad, b_pad, b_msk


def _tile_rows(batch, d, *, max_rows=2048, x_budget_bytes=16 << 20):
    """Row tile sized from a VMEM budget for the double-buffered x tiles."""
    tb = x_budget_bytes // (2 * d * 4)           # rows s.t. 2 x-buffers fit budget
    tb = max(8, min(int(tb), max_rows))
    tb = (tb // 8) * 8
    batch8 = ((batch + 7) // 8) * 8              # round-to-8, not next_pow2
    tb = min(tb, batch8)
    b_padded = pl.cdiv(batch, tb) * tb
    return tb, b_padded


def classify_forward(x, params, y=None):
    """Mirrors ClassifyModel.forward: returns logits if y is None else loss."""
    w_pad, b_pad, b_msk = _fold_params(params)
    batch, d = x.shape

    tb, b_padded = _tile_rows(batch, d)
    if b_padded != batch:
        x = jnp.pad(x, ((0, b_padded - batch), (0, 0)))
    grid = (b_padded // tb,)

    x_spec = pl.BlockSpec((tb, d), lambda i: (i, 0))
    w_spec = pl.BlockSpec((d, OUT_LANES), lambda i: (0, 0))
    b_spec = pl.BlockSpec((1, OUT_LANES), lambda i: (0, 0))
    out_spec = pl.BlockSpec((tb, OUT_LANES), lambda i: (i, 0))

    # VMEM: double-buffered x / out / y tiles + resident W/b, with headroom.
    vmem_need = 2 * tb * (d + OUT_LANES + 1) * 4 + 2 * (d + 1) * OUT_LANES * 4
    vmem_limit = int(min(max(2 * vmem_need, 8 << 20), 56 << 20))
    cparams = pltpu.CompilerParams(
        dimension_semantics=("parallel",), vmem_limit_bytes=vmem_limit)

    if y is None:
        out = pl.pallas_call(
            _logits_kernel,
            out_shape=jax.ShapeDtypeStruct((b_padded, OUT_LANES), jnp.float32),
            grid=grid,
            in_specs=[x_spec, w_spec, b_spec],
            out_specs=out_spec,
            compiler_params=cparams,
        )(x, w_pad, b_pad)
        # Cheap lane trim (only 8 lanes, and no row padding when batch % 8 == 0).
        return out[:batch, :NUM_CLASSES]

    y = y.astype(jnp.int32).reshape(-1, 1)
    if b_padded != batch:
        y = jnp.pad(y, ((0, b_padded - batch), (0, 0)))
    y_spec = pl.BlockSpec((tb, 1), lambda i: (i, 0))

    per_row = pl.pallas_call(
        functools.partial(_loss_kernel, batch=batch),
        out_shape=jax.ShapeDtypeStruct((b_padded, OUT_LANES), jnp.float32),
        grid=grid,
        in_specs=[x_spec, w_spec, b_spec, y_spec],
        out_specs=out_spec,
        compiler_params=cparams,
    )(x, w_pad, b_msk, y)
    # Pad rows and lanes > 0 are zero; tiny reduction done in the wrapper.
    return jnp.sum(per_row) / jnp.float32(batch)


def init_params(input_size, key):
    """Deterministic init mimicking torch.nn.Linear (uniform +-1/sqrt(fan_in))."""
    k1, k2, k3, k4 = jax.random.split(key, 4)
    lim1 = 1.0 / jnp.sqrt(float(input_size))
    lim2 = 1.0 / jnp.sqrt(float(HIDDEN))
    # stored as (in, out) so the math is x @ W + b
    w1 = jax.random.uniform(k1, (input_size, HIDDEN), jnp.float32, -lim1, lim1)
    b1 = jax.random.uniform(k2, (1, HIDDEN), jnp.float32, -lim1, lim1)
    w2 = jax.random.uniform(k3, (HIDDEN, NUM_CLASSES), jnp.float32, -lim2, lim2)
    b2 = jax.random.uniform(k4, (1, NUM_CLASSES), jnp.float32, -lim2, lim2)
    return w1, b1, w2, b2


# ------------------------------- main ---------------------------------------

if __name__ == "__main__":
    INPUT_SIZE = 32
    BATCH = 8

    key = jax.random.PRNGKey(0)
    kx, ky, kp = jax.random.split(key, 3)

    x = jax.random.normal(kx, (BATCH, INPUT_SIZE), dtype=jnp.float32)
    y = jax.random.randint(ky, (BATCH,), 0, NUM_CLASSES, dtype=jnp.int32)
    params = init_params(INPUT_SIZE, kp)

    # inference path: forward(x) -> logits (B, 5)
    logits = classify_forward(x, params)
    jax.block_until_ready(logits)
    assert logits.shape == (BATCH, NUM_CLASSES)

    # training path: forward(x, y) -> scalar cross-entropy loss
    loss = classify_forward(x, params, y)
    jax.block_until_ready(loss)

    # sanity check against pure-JAX reference (unfused, torch-style math)
    w1, b1, w2, b2 = params
    hi = jax.lax.Precision.HIGHEST
    ref_logits = jnp.dot(jnp.dot(x, w1, precision=hi) + b1, w2,
                         precision=hi) + b2
    ref_loss = jnp.mean(
        jax.nn.logsumexp(ref_logits, axis=-1)
        - jnp.take_along_axis(ref_logits, y[:, None], axis=-1)[:, 0])
    assert jnp.allclose(logits, ref_logits, atol=1e-4)
    assert jnp.allclose(loss, ref_loss, atol=1e-4)

    print("KERNEL_OK")
</pallas_src>

<mosaic_0001>
module attributes {stable_mosaic.version = 11 : i64} {
  func.func @_logits_kernel(%arg0: i32, %arg1: memref<8x32xf32, #tpu.memory_space<vmem>>, %arg2: memref<32x8xf32, #tpu.memory_space<vmem>>, %arg3: memref<1x8xf32, #tpu.memory_space<vmem>>, %arg4: memref<8x8xf32, #tpu.memory_space<vmem>>) attributes {dimension_semantics = [#tpu.dimension_semantics<parallel>], iteration_bounds = array<i64: 1>, scalar_prefetch = 0 : i64, scratch_operands = 0 : i64, tpu.core_type = #tpu.core_type<tc>, window_params = [{transform_indices = @transform_0, window_bounds = array<i64: 8, 32>}, {pipeline_mode = #tpu.pipeline_mode<synchronous>, transform_indices = @transform_1, window_bounds = array<i64: 32, 8>}, {pipeline_mode = #tpu.pipeline_mode<synchronous>, transform_indices = @transform_2, window_bounds = array<i64: 1, 8>}, {transform_indices = @transform_3, window_bounds = array<i64: 8, 8>}]} {
    %c0 = arith.constant 0 : index
    %c0_0 = arith.constant 0 : index
    %0 = vector.load %arg1[%c0, %c0_0] : memref<8x32xf32, #tpu.memory_space<vmem>>, vector<8x32xf32>
    %c0_1 = arith.constant 0 : index
    %c0_2 = arith.constant 0 : index
    %1 = vector.load %arg2[%c0_1, %c0_2] : memref<32x8xf32, #tpu.memory_space<vmem>>, vector<32x8xf32>
    %cst = arith.constant dense<0.000000e+00> : vector<8x8xf32>
    %2 = tpu.matmul %0, %1, %cst {dimension_numbers = #tpu.dot_dimension_numbers<[1], [0], [0], [1], [0, 0, 1, 1], [], []>} : vector<8x32xf32>, vector<32x8xf32>, vector<8x8xf32> -> vector<8x8xf32>
    %c0_3 = arith.constant 0 : index
    %c0_4 = arith.constant 0 : index
    %3 = vector.load %arg3[%c0_3, %c0_4] : memref<1x8xf32, #tpu.memory_space<vmem>>, vector<1x8xf32>
    %4 = vector.broadcast %3 : vector<1x8xf32> to vector<8x8xf32>
    %5 = arith.addf %2, %4 : vector<8x8xf32>
    %c0_5 = arith.constant 0 : index
    %c0_6 = arith.constant 0 : index
    %6 = vector.load %arg4[%c0_5, %c0_6] : memref<8x8xf32, #tpu.memory_space<vmem>>, vector<8x8xf32>
    tpu.vector_store %arg4[%c0_5, %c0_6], %5 {strides = array<i32>} : memref<8x8xf32, #tpu.memory_space<vmem>>, vector<8x8xf32>,
    return
  }
  func.func @transform_0(%arg0: i32) -> (i32, i32) {
    %c0_i32 = arith.constant 0 : i32
    %c0_i32_0 = arith.constant 0 : i32
    return %arg0, %c0_i32 : i32, i32
  }
  func.func @transform_1(%arg0: i32) -> (i32, i32) {
    %c0_i32 = arith.constant 0 : i32
    %c0_i32_0 = arith.constant 0 : i32
    %c0_i32_1 = arith.constant 0 : i32
    return %c0_i32, %c0_i32_0 : i32, i32
  }
  func.func @transform_2(%arg0: i32) -> (i32, i32) {
    %c0_i32 = arith.constant 0 : i32
    %c0_i32_0 = arith.constant 0 : i32
    %c0_i32_1 = arith.constant 0 : i32
    return %c0_i32, %c0_i32_0 : i32, i32
  }
  func.func @transform_3(%arg0: i32) -> (i32, i32) {
    %c0_i32 = arith.constant 0 : i32
    %c0_i32_0 = arith.constant 0 : i32
    return %arg0, %c0_i32 : i32, i32
  }
}

</mosaic_0001>

<llo_original>
// kernel: tpu_custom_call.1
$region0: #{tpu_custom_call.1}
  #allocation0 [shape = 'u32[]', space=smem, size = 0x4, offset = 0x4, fixed_abs, tag = 'smem constant byte address 0x4 - core index']
  #allocation1 [shape = 'u32[144,128]{1,0:T(1,128)}', space=vmem, size = 0x12000, scoped, tag = 'internal scratch']
  %s0 = inlined_call_operand.vmem [shape: f32[8,32], index: 0, kind: input, shape index: {}]
  %s1 = inlined_call_operand.vmem [shape: f32[32,8], index: 1, kind: input, shape index: {}]
  %s2 = inlined_call_operand.vmem [shape: f32[1,8], index: 2, kind: input, shape index: {}]
  %s3 = inlined_call_operand.hbm [shape: f32[8,8], index: 3, kind: output, shape index: {}]
  %s4 = sld [smem:[#allocation0]]
  $region22: #{tpu_custom_call.1} parent=0
    _
  %s6 = ssub.s32 1, %s4
  %s7 = scalar_select 0, %s6, %s4
  $region1: #{tpu_custom_call.1} parent=0
    #allocation2 [shape = 'u8[4096]{0}', space=vmem, size = 0x1000, scoped, tag = 'output window, operand 0, single buffered']
    #allocation3 [shape = 's32[1]{0}', space=sflag, size = 0x4, scoped, tag = 'scoped memory for tpu_custom_call.1']
    %8 = vsyncpa [#allocation3], 0
    // Predicated region
    $region2: #{tpu_custom_call.1} parent=1 // pred_check
      _
    $region3: #{tpu_custom_call.1} parent=1 // pred_check_branch
      %10 = sbr.rel (0) target = $region5
    $region4: #{tpu_custom_call.1} parent=1 // pred_region
      _
    $region5: #{tpu_custom_call.1} parent=1 // pred_fallthru
      _
    // Predicated region
    $region6: #{tpu_custom_call.1} parent=1 // pred_check
      _
    $region7: #{tpu_custom_call.1} parent=1 // pred_check_branch
      %12 = sbr.rel (0) target = $region9
    $region8: #{tpu_custom_call.1} parent=1 // pred_region
      _
    $region9: #{tpu_custom_call.1} parent=1 // pred_fallthru
      _
    // Predicated region
    $region10: #{tpu_custom_call.1} parent=1 // pred_check
      _
    $region11: #{tpu_custom_call.1} parent=1 // pred_check_branch
      %14 = sbr.rel (0) target = $region13
    $region12: #{tpu_custom_call.1} parent=1 // pred_region
      _
    $region13: #{tpu_custom_call.1} parent=1 // pred_fallthru
      _
    %v15 = vld [vmem:[%s0] sm:$0xff]
    %v16 = vld [vmem:[%s1] sm:$0xff]
    %v17 = vld [vmem:[%s1 + $0x8] sm:$0xff]
    %v18 = vld [vmem:[%s1 + $0x10] sm:$0xff]
    %v19 = vld [vmem:[%s1 + $0x18] sm:$0xff]
    %v20 = vld [vmem:[%s2] sm:$0x1]
    %v22 = vlaneseq
    %v23 = vshrl.u32 %v22, 7
    %v24 = vsub.s32 0, %v23
    %v25 = vrot.slane %v20, %v24
    %vm27 = vcmask 261120
    %v29 = vsel %vm27, %v15, 0
    %31 = vmatprep.subr.mxu0 0.0
    %32 = vmatpush1.msra.mxu0 %v16
    %33 = vmatprep.subr.mxu0 0.0
    %34 = vmatpush1.msra.mxu0 %v17
    %35 = vmatprep.subr.mxu0 0.0
    %36 = vmatpush1.msra.mxu0 %v18
    %37 = vmatprep.subr.mxu0 0.0
    %38 = vmatpush1.msra.mxu0 %v19
    %39 = vmatprep.subr.mxu0 0.0
    %40 = vmatpush1.msra.mxu0 0.0
    %41 = vmatprep.subr.mxu0 0.0
    %42 = vmatpush1.msra.mxu0 0.0
    %43 = vmatprep.subr.mxu0 0.0
    %44 = vmatpush1.msra.mxu0 0.0
    %45 = vmatprep.subr.mxu0 0.0
    %46 = vmatpush1.msra.mxu0 0.0
    %47 = vmatprep.subr.mxu0 0.0
    %48 = vmatpush1.msra.mxu0 0.0
    %49 = vmatprep.subr.mxu0 0.0
    %50 = vmatpush1.msra.mxu0 0.0
    %51 = vmatprep.subr.mxu0 0.0
    %52 = vmatpush1.msra.mxu0 0.0
    %53 = vmatprep.subr.mxu0 0.0
    %54 = vmatpush1.msra.mxu0 0.0
    %55 = vmatprep.subr.mxu0 0.0
    %56 = vmatpush1.msra.mxu0 0.0
    %57 = vmatprep.subr.mxu0 0.0
    %58 = vmatpush1.msra.mxu0 0.0
    %59 = vmatprep.subr.mxu0 0.0
    %60 = vmatpush1.msra.mxu0 0.0
    %61 = vmatprep.subr.mxu0 0.0
    %62 = vmatpush1.msra.mxu0 0.0
    %63 = vmatprep.subr.mxu0 0.0
    %64 = vmatpush1.msra.mxu0 0.0
    %65 = vmatprep.subr.mxu0 0.0
    %66 = vmatpush1.msra.mxu0 0.0
    %67 = vmatprep.subr.mxu0 0.0
    %68 = vmatpush1.msra.mxu0 0.0
    %69 = vmatprep.subr.mxu0 0.0
    %70 = vmatpush1.msra.mxu0 0.0
    %71 = vmatprep.subr.mxu0 0.0
    %72 = vmatpush1.msra.mxu0 0.0
    %73 = vmatprep.subr.mxu0 0.0
    %74 = vmatpush1.msra.mxu0 0.0
    %75 = vmatprep.subr.mxu0 0.0
    %76 = vmatpush1.msra.mxu0 0.0
    %77 = vmatprep.subr.mxu0 0.0
    %78 = vmatpush1.msra.mxu0 0.0
    %79 = vmatprep.subr.mxu0 0.0
    %80 = vmatpush1.msra.mxu0 0.0
    %81 = vmatprep.subr.mxu0 0.0
    %82 = vmatpush1.msra.mxu0 0.0
    %83 = vmatprep.subr.mxu0 0.0
    %84 = vmatpush1.msra.mxu0 0.0
    %85 = vmatprep.subr.mxu0 0.0
    %86 = vmatpush1.msra.mxu0 0.0
    %87 = vmatprep.subr.mxu0 0.0
    %88 = vmatpush1.msra.mxu0 0.0
    %89 = vmatprep.subr.mxu0 0.0
    %90 = vmatpush1.msra.mxu0 0.0
    %91 = vmatprep.subr.mxu0 0.0
    %92 = vmatpush1.msra.mxu0 0.0
    %93 = vmatprep.subr.mxu0 0.0
    %94 = vmatpush1.msra.mxu0 0.0
    %95 = vmatprep.mubr.f32.mxu0 0.0
    %96 = vmatmul.mubr.f32.gmra.mrb[0].mxu0 %v29
    %v97 = vpop.f32.mrb[0].mxu0
    %v98 = vadd.f32 %v25, %v97
    %v99 = vpop.f32.mrb[0].mxu0
    %100 = vdwg.mxu0
    %vm101 = vcmask 64512
    %102 = vst.msk [vmem:[#allocation2] sm:$0xff] %vm101, %v98
    // Predicated region
    $region14: #{tpu_custom_call.1} parent=1 // pred_check
      _
    $region15: #{tpu_custom_call.1} parent=1 // pred_check_branch
      %104 = sbr.rel (0) target = $region17
    $region16: #{tpu_custom_call.1} parent=1 // pred_region
      %s106 = ssub.s32 128, 128
      %107 = vsyncadd [#allocation3], %s106
      %s109 = sshll.u32 [#allocation2], 4
      %s110 = int_to_ptr.vmem [resolvable:$true] %s109
      %112 = dma.vmem_to_hbm [thread:$0]  %s110, 128, %s3, [#allocation3]
    $region17: #{tpu_custom_call.1} parent=1 // pred_fallthru
      _
    // Predicated region
    $region18: #{tpu_custom_call.1} parent=1 // pred_check
      _
    $region19: #{tpu_custom_call.1} parent=1 // pred_check_branch
      %114 = sbr.rel (0) target = $region21
    $region20: #{tpu_custom_call.1} parent=1 // pred_region
      %115 = dma.done [#allocation3], 128
    $region21: #{tpu_custom_call.1} parent=1 // pred_fallthru
      _
    %116 = vsyncpa [#allocation3], 1

</llo_original>
